<compile_context>
chip_gen: v7x
topology: tpu7x:2x2x1
jax: 0.10.0
libtpu: 0.0.40
codegen_flags: <defaults>
</compile_context>

<pallas_src>
import functools

import numpy as np
import jax
import jax.numpy as jnp
from jax.experimental import pallas as pl
from jax.experimental.pallas import tpu as pltpu


def _cdiv(a, b):
    return -(-a // b)


def _round_up(a, b):
    return _cdiv(a, b) * b


def _focal_loss_kernel(x_ref, t_ref, out_ref, *, num_classes, gamma, alpha):
    """Grid = (B, n_blocks). One step sees:
         x_ref  : (1, C, TS, 128)  logits block
         t_ref  : (1, TS, 128)     int32 labels (-1 marks padding)
         out_ref: (1, 1, 8, 128)   f32 partial sum for this (batch, block)
    """
    tgt = t_ref[0]                                          # (TS, 128) int32

    # ---- pass 1: running max over C, fused with the x[target] / alpha[target]
    #      channel "gather" via static compare+select (pure VPU, no XLU). ----
    xc = x_ref[0, 0].astype(jnp.float32)                    # (TS, 128)
    m = xc
    is_c = tgt == 0
    x_t = jnp.where(is_c, xc, jnp.float32(0.0))
    at = (jnp.where(is_c, jnp.float32(alpha[0]), jnp.float32(0.0))
          if alpha is not None else None)
    for c in range(1, num_classes):
        xc = x_ref[0, c].astype(jnp.float32)
        m = jnp.maximum(m, xc)
        is_c = tgt == c
        x_t = jnp.where(is_c, xc, x_t)
        if alpha is not None:
            at = jnp.where(is_c, jnp.float32(alpha[c]), at)

    # ---- pass 2: sum of exp over C (EUP exp + VPU add) ---------------------
    s = jnp.zeros_like(m)
    for c in range(num_classes):
        s = s + jnp.exp(x_ref[0, c].astype(jnp.float32) - m)

    logpt = (x_t - m) - jnp.log(s)                          # (TS, 128)
    pt = jnp.exp(logpt)
    if alpha is not None:
        logpt = logpt * at

    # (1 - pt)**gamma : unrolled multiplies for non-negative integer gamma
    # (default 2); exp/log fallback otherwise.
    base = 1.0 - pt
    g = float(gamma)
    if g == int(g) and g >= 0:
        focal = jnp.ones_like(base)
        for _ in range(int(g)):
            focal = focal * base
    else:
        focal = jnp.exp(g * jnp.log(jnp.maximum(base, jnp.float32(1e-30))))

    loss = -focal * logpt                                   # (TS, 128)
    # Padded positions (label == -1) contribute zero.
    # TODO(synk): labels outside [0, C) (e.g. ignore_index) are masked to zero
    # here instead of erroring like the PyTorch gather would.
    loss = jnp.where((tgt >= 0) & (tgt < num_classes), loss, jnp.float32(0.0))

    # Fold (TS, 128) -> (8, 128) with elementwise vreg adds (no XLU reduce,
    # no narrow masked store); the wrapper does the final scalar reduction.
    ts = loss.shape[0]
    out_ref[0, 0] = jnp.sum(loss.reshape(ts // 8, 8, 128), axis=0)


def _choose_rows_per_block(rows_needed, num_classes, itemsize,
                           budget_bytes=20 << 20):
    """Rows (of 128 lanes) per spatial block, sized against the true VMEM
    footprint: 2x double-buffered logits block + 2x int32 labels block +
    ~6 live f32 (TS,128) temporaries.  Returns (rows_per_block, n_blocks);
    blocks are balanced so padding never exceeds 8 rows per block."""
    bytes_per_row = 128 * (2 * num_classes * itemsize + 2 * 4 + 6 * 4)
    max_rows = max(8, (budget_bytes // bytes_per_row) // 8 * 8)
    n_blocks = _cdiv(rows_needed, max_rows)
    rows_per_block = _round_up(_cdiv(rows_needed, n_blocks), 8)
    return rows_per_block, n_blocks


def focal_loss_pallas(logits, target, gamma=2, alpha=None, size_average=True):
    """logits: (B, C, *spatial) or (N, C); target: matching integer labels."""
    # Normalize to channel-leading (B, C, S) with contiguous reshapes only
    # (the 2-D row case needs one small XLA transpose, done outside the kernel).
    if logits.ndim == 2:
        B, C, S = 1, logits.shape[1], logits.shape[0]
        x = jnp.transpose(logits, (1, 0)).reshape(1, C, S)
        t = target.reshape(1, S)
    else:
        assert logits.ndim >= 3, "expecting (B, C, *spatial) logits"
        B, C = logits.shape[0], logits.shape[1]
        S = int(np.prod(logits.shape[2:]))
        x = logits.reshape(B, C, S)
        t = target.reshape(B, S)
    t = t.astype(jnp.int32)

    # Mirror the PyTorch alpha normalization.
    if isinstance(alpha, (float, int)) and not isinstance(alpha, bool):
        alpha = (float(alpha), 1.0 - float(alpha))
    elif alpha is not None:
        alpha = tuple(float(a) for a in alpha)

    # Lane-dense tiling: pad S up to rows_pad*128 (labels padded with -1).
    rows_needed = _cdiv(S, 128)
    TS, n_blocks = _choose_rows_per_block(rows_needed, C, x.dtype.itemsize)
    rows_pad = TS * n_blocks
    S_pad = rows_pad * 128
    if S_pad != S:
        x = jnp.pad(x, ((0, 0), (0, 0), (0, S_pad - S)))
        t = jnp.pad(t, ((0, 0), (0, S_pad - S)), constant_values=-1)
    x = x.reshape(B, C, rows_pad, 128)
    t = t.reshape(B, rows_pad, 128)

    kernel = functools.partial(
        _focal_loss_kernel, num_classes=C, gamma=gamma, alpha=alpha)

    partials = pl.pallas_call(
        kernel,
        out_shape=jax.ShapeDtypeStruct((B, n_blocks, 8, 128), jnp.float32),
        grid_spec=pltpu.PrefetchScalarGridSpec(
            num_scalar_prefetch=0,
            grid=(B, n_blocks),
            in_specs=[
                pl.BlockSpec((1, C, TS, 128), lambda b, h: (b, 0, h, 0)),
                pl.BlockSpec((1, TS, 128), lambda b, h: (b, h, 0)),
            ],
            out_specs=pl.BlockSpec((1, 1, 8, 128), lambda b, h: (b, h, 0, 0)),
        ),
        compiler_params=pltpu.CompilerParams(
            # Both axes independent (each output block written exactly once),
            # so v7x megacore can shard either axis; harmless on v5e/v6e.
            dimension_semantics=("parallel", "parallel"),
            vmem_limit_bytes=48 * 1024 * 1024,
        ),
    )(x, t)

    total = jnp.sum(partials)
    n_elems = B * S  # true (unpadded) element count
    return total / jnp.float32(n_elems) if size_average else total


def _reference_numpy(logits, target, gamma, alpha, size_average):
    """Pure-numpy mirror of the PyTorch forward (source of truth)."""
    B, C = logits.shape[0], logits.shape[1]
    x = logits.reshape(B, C, -1).transpose(0, 2, 1).reshape(-1, C).astype(np.float64)
    t = target.reshape(-1).astype(np.int64)
    m = x.max(axis=1, keepdims=True)
    logsm = (x - m) - np.log(np.exp(x - m).sum(axis=1, keepdims=True))
    logpt = logsm[np.arange(x.shape[0]), t]
    pt = np.exp(logpt)
    if alpha is not None:
        if isinstance(alpha, (float, int)) and not isinstance(alpha, bool):
            a = np.array([alpha, 1.0 - alpha], dtype=np.float64)
        else:
            a = np.asarray(alpha, dtype=np.float64)
        logpt = logpt * a[t]
    loss = -((1.0 - pt) ** float(gamma)) * logpt
    return float(loss.mean() if size_average else loss.sum())


if __name__ == "__main__":
    B, C, H, W = 2, 4, 16, 16
    key = jax.random.PRNGKey(0)
    k1, k2 = jax.random.split(key)

    logits = jax.random.normal(k1, (B, C, H, W), dtype=jnp.float32)
    target = jax.random.randint(k2, (B, H, W), 0, C, dtype=jnp.int32)
    logits_np = np.asarray(logits, np.float32)
    target_np = np.asarray(target)

    # case 1: default (gamma=2, alpha=None, mean)
    loss1 = jax.block_until_ready(focal_loss_pallas(logits, target, gamma=2))
    ref1 = _reference_numpy(logits_np, target_np, gamma=2, alpha=None,
                            size_average=True)
    assert np.allclose(float(loss1), ref1, rtol=1e-3, atol=1e-5), (float(loss1), ref1)

    # case 2: per-class alpha weights
    alpha = [0.1, 0.2, 0.3, 0.4]
    loss2 = jax.block_until_ready(
        focal_loss_pallas(logits, target, gamma=2, alpha=alpha))
    ref2 = _reference_numpy(logits_np, target_np, gamma=2, alpha=alpha,
                            size_average=True)
    assert np.allclose(float(loss2), ref2, rtol=1e-3, atol=1e-5), (float(loss2), ref2)

    # case 3: sum reduction (size_average=False)
    loss3 = jax.block_until_ready(
        focal_loss_pallas(logits, target, gamma=2, size_average=False))
    ref3 = _reference_numpy(logits_np, target_np, gamma=2, alpha=None,
                            size_average=False)
    assert np.allclose(float(loss3), ref3, rtol=1e-3, atol=1e-4), (float(loss3), ref3)

    print("KERNEL_OK")
</pallas_src>

<mosaic_0001>
module attributes {stable_mosaic.version = 11 : i64} {
  func.func @_focal_loss_kernel(%arg0: i32, %arg1: i32, %arg2: memref<1x4x8x128xf32, #tpu.memory_space<vmem>>, %arg3: memref<1x8x128xi32, #tpu.memory_space<vmem>>, %arg4: memref<1x1x8x128xf32, #tpu.memory_space<vmem>>) attributes {dimension_semantics = [#tpu.dimension_semantics<parallel>, #tpu.dimension_semantics<parallel>], iteration_bounds = array<i64: 2, 1>, scalar_prefetch = 0 : i64, scratch_operands = 0 : i64, tpu.core_type = #tpu.core_type<tc>, window_params = [{transform_indices = @transform_0, window_bounds = array<i64: 1, 4, 8, 128>}, {transform_indices = @transform_1, window_bounds = array<i64: 1, 8, 128>}, {transform_indices = @transform_2, window_bounds = array<i64: 1, 1, 8, 128>}]} {
    %c0 = arith.constant 0 : index
    %c0_0 = arith.constant 0 : index
    %c0_1 = arith.constant 0 : index
    %0 = vector.load %arg3[%c0, %c0_0, %c0_1] : memref<1x8x128xi32, #tpu.memory_space<vmem>>, vector<1x8x128xi32>
    %1 = vector.shape_cast %0 : vector<1x8x128xi32> to vector<8x128xi32>
    %c0_2 = arith.constant 0 : index
    %c0_3 = arith.constant 0 : index
    %c0_4 = arith.constant 0 : index
    %c0_5 = arith.constant 0 : index
    %2 = vector.load %arg2[%c0_2, %c0_3, %c0_4, %c0_5] : memref<1x4x8x128xf32, #tpu.memory_space<vmem>>, vector<1x1x8x128xf32>
    %3 = vector.shape_cast %2 : vector<1x1x8x128xf32> to vector<8x128xf32>
    %c0_i32 = arith.constant 0 : i32
    %4 = vector.broadcast %c0_i32 : i32 to vector<8x128xi32>
    %5 = arith.cmpi eq, %1, %4 : vector<8x128xi32>
    %cst = arith.constant 0.000000e+00 : f32
    %6 = vector.broadcast %cst : f32 to vector<8x128xf32>
    %7 = arith.select %5, %3, %6 : vector<8x128xi1>, vector<8x128xf32>
    %c0_6 = arith.constant 0 : index
    %c1 = arith.constant 1 : index
    %c0_7 = arith.constant 0 : index
    %c0_8 = arith.constant 0 : index
    %8 = vector.load %arg2[%c0_6, %c1, %c0_7, %c0_8] : memref<1x4x8x128xf32, #tpu.memory_space<vmem>>, vector<1x1x8x128xf32>
    %9 = vector.shape_cast %8 : vector<1x1x8x128xf32> to vector<8x128xf32>
    %10 = arith.maximumf %3, %9 : vector<8x128xf32>
    %c1_i32 = arith.constant 1 : i32
    %11 = vector.broadcast %c1_i32 : i32 to vector<8x128xi32>
    %12 = arith.cmpi eq, %1, %11 : vector<8x128xi32>
    %13 = arith.select %12, %9, %7 : vector<8x128xi1>, vector<8x128xf32>
    %c0_9 = arith.constant 0 : index
    %c2 = arith.constant 2 : index
    %c0_10 = arith.constant 0 : index
    %c0_11 = arith.constant 0 : index
    %14 = vector.load %arg2[%c0_9, %c2, %c0_10, %c0_11] : memref<1x4x8x128xf32, #tpu.memory_space<vmem>>, vector<1x1x8x128xf32>
    %15 = vector.shape_cast %14 : vector<1x1x8x128xf32> to vector<8x128xf32>
    %16 = arith.maximumf %10, %15 : vector<8x128xf32>
    %c2_i32 = arith.constant 2 : i32
    %17 = vector.broadcast %c2_i32 : i32 to vector<8x128xi32>
    %18 = arith.cmpi eq, %1, %17 : vector<8x128xi32>
    %19 = arith.select %18, %15, %13 : vector<8x128xi1>, vector<8x128xf32>
    %c0_12 = arith.constant 0 : index
    %c3 = arith.constant 3 : index
    %c0_13 = arith.constant 0 : index
    %c0_14 = arith.constant 0 : index
    %20 = vector.load %arg2[%c0_12, %c3, %c0_13, %c0_14] : memref<1x4x8x128xf32, #tpu.memory_space<vmem>>, vector<1x1x8x128xf32>
    %21 = vector.shape_cast %20 : vector<1x1x8x128xf32> to vector<8x128xf32>
    %22 = arith.maximumf %16, %21 : vector<8x128xf32>
    %c3_i32 = arith.constant 3 : i32
    %23 = vector.broadcast %c3_i32 : i32 to vector<8x128xi32>
    %24 = arith.cmpi eq, %1, %23 : vector<8x128xi32>
    %25 = arith.select %24, %21, %19 : vector<8x128xi1>, vector<8x128xf32>
    %cst_15 = arith.constant 0.000000e+00 : f32
    %26 = vector.broadcast %cst_15 : f32 to vector<8x128xf32>
    %c0_16 = arith.constant 0 : index
    %c0_17 = arith.constant 0 : index
    %c0_18 = arith.constant 0 : index
    %c0_19 = arith.constant 0 : index
    %27 = vector.load %arg2[%c0_16, %c0_17, %c0_18, %c0_19] : memref<1x4x8x128xf32, #tpu.memory_space<vmem>>, vector<1x1x8x128xf32>
    %28 = vector.shape_cast %27 : vector<1x1x8x128xf32> to vector<8x128xf32>
    %29 = arith.subf %28, %22 : vector<8x128xf32>
    %30 = math.exp %29 : vector<8x128xf32>
    %31 = arith.addf %26, %30 : vector<8x128xf32>
    %c0_20 = arith.constant 0 : index
    %c1_21 = arith.constant 1 : index
    %c0_22 = arith.constant 0 : index
    %c0_23 = arith.constant 0 : index
    %32 = vector.load %arg2[%c0_20, %c1_21, %c0_22, %c0_23] : memref<1x4x8x128xf32, #tpu.memory_space<vmem>>, vector<1x1x8x128xf32>
    %33 = vector.shape_cast %32 : vector<1x1x8x128xf32> to vector<8x128xf32>
    %34 = arith.subf %33, %22 : vector<8x128xf32>
    %35 = math.exp %34 : vector<8x128xf32>
    %36 = arith.addf %31, %35 : vector<8x128xf32>
    %c0_24 = arith.constant 0 : index
    %c2_25 = arith.constant 2 : index
    %c0_26 = arith.constant 0 : index
    %c0_27 = arith.constant 0 : index
    %37 = vector.load %arg2[%c0_24, %c2_25, %c0_26, %c0_27] : memref<1x4x8x128xf32, #tpu.memory_space<vmem>>, vector<1x1x8x128xf32>
    %38 = vector.shape_cast %37 : vector<1x1x8x128xf32> to vector<8x128xf32>
    %39 = arith.subf %38, %22 : vector<8x128xf32>
    %40 = math.exp %39 : vector<8x128xf32>
    %41 = arith.addf %36, %40 : vector<8x128xf32>
    %c0_28 = arith.constant 0 : index
    %c3_29 = arith.constant 3 : index
    %c0_30 = arith.constant 0 : index
    %c0_31 = arith.constant 0 : index
    %42 = vector.load %arg2[%c0_28, %c3_29, %c0_30, %c0_31] : memref<1x4x8x128xf32, #tpu.memory_space<vmem>>, vector<1x1x8x128xf32>
    %43 = vector.shape_cast %42 : vector<1x1x8x128xf32> to vector<8x128xf32>
    %44 = arith.subf %43, %22 : vector<8x128xf32>
    %45 = math.exp %44 : vector<8x128xf32>
    %46 = arith.addf %41, %45 : vector<8x128xf32>
    %47 = arith.subf %25, %22 : vector<8x128xf32>
    %48 = math.log %46 : vector<8x128xf32>
    %49 = arith.subf %47, %48 : vector<8x128xf32>
    %50 = math.exp %49 : vector<8x128xf32>
    %cst_32 = arith.constant 1.000000e+00 : f32
    %51 = vector.broadcast %cst_32 : f32 to vector<8x128xf32>
    %52 = arith.subf %51, %50 : vector<8x128xf32>
    %cst_33 = arith.constant 1.000000e+00 : f32
    %53 = vector.broadcast %cst_33 : f32 to vector<8x128xf32>
    %54 = arith.mulf %53, %52 : vector<8x128xf32>
    %55 = arith.mulf %54, %52 : vector<8x128xf32>
    %cst_34 = arith.constant 0.000000e+00 : f32
    %56 = vector.broadcast %cst_34 : f32 to vector<8x128xf32>
    %57 = arith.subf %56, %55 : vector<8x128xf32>
    %58 = arith.mulf %57, %49 : vector<8x128xf32>
    %c0_i32_35 = arith.constant 0 : i32
    %59 = vector.broadcast %c0_i32_35 : i32 to vector<8x128xi32>
    %60 = arith.cmpi sge, %1, %59 : vector<8x128xi32>
    %c4_i32 = arith.constant 4 : i32
    %61 = vector.broadcast %c4_i32 : i32 to vector<8x128xi32>
    %62 = arith.cmpi slt, %1, %61 : vector<8x128xi32>
    %63 = arith.andi %60, %62 : vector<8x128xi1>
    %cst_36 = arith.constant 0.000000e+00 : f32
    %64 = vector.broadcast %cst_36 : f32 to vector<8x128xf32>
    %65 = arith.select %63, %58, %64 : vector<8x128xi1>, vector<8x128xf32>
    %66 = vector.shape_cast %65 : vector<8x128xf32> to vector<1x8x128xf32>
    %cst_37 = arith.constant dense<0.000000e+00> : vector<8x128xf32>
    %67 = vector.multi_reduction <add>, %66, %cst_37 [0] : vector<1x8x128xf32> to vector<8x128xf32>
    %c0_38 = arith.constant 0 : index
    %c0_39 = arith.constant 0 : index
    %c0_40 = arith.constant 0 : index
    %c0_41 = arith.constant 0 : index
    %68 = vector.load %arg4[%c0_38, %c0_39, %c0_40, %c0_41] : memref<1x1x8x128xf32, #tpu.memory_space<vmem>>, vector<1x1x8x128xf32>
    %69 = vector.shape_cast %68 : vector<1x1x8x128xf32> to vector<8x128xf32>
    %70 = vector.shape_cast %67 : vector<8x128xf32> to vector<1x1x8x128xf32>
    tpu.vector_store %arg4[%c0_38, %c0_39, %c0_40, %c0_41], %70 {strides = array<i32>} : memref<1x1x8x128xf32, #tpu.memory_space<vmem>>, vector<1x1x8x128xf32>,
    return
  }
  func.func @transform_0(%arg0: i32, %arg1: i32) -> (i32, i32, i32, i32) {
    %c0_i32 = arith.constant 0 : i32
    %c0_i32_0 = arith.constant 0 : i32
    %c0_i32_1 = arith.constant 0 : i32
    return %arg0, %c0_i32, %arg1, %c0_i32_0 : i32, i32, i32, i32
  }
  func.func @transform_1(%arg0: i32, %arg1: i32) -> (i32, i32, i32) {
    %c0_i32 = arith.constant 0 : i32
    %c0_i32_0 = arith.constant 0 : i32
    return %arg0, %arg1, %c0_i32 : i32, i32, i32
  }
  func.func @transform_2(%arg0: i32, %arg1: i32) -> (i32, i32, i32, i32) {
    %c0_i32 = arith.constant 0 : i32
    %c0_i32_0 = arith.constant 0 : i32
    %c0_i32_1 = arith.constant 0 : i32
    return %arg0, %arg1, %c0_i32, %c0_i32_0 : i32, i32, i32, i32
  }
}

</mosaic_0001>

<llo_original>
// kernel: tpu_custom_call.1
$region0: #{tpu_custom_call.1}
  #allocation0 [shape = 'u32[]', space=smem, size = 0x4, offset = 0x4, fixed_abs, tag = 'smem constant byte address 0x4 - core index']
  #allocation1 [shape = 'u32[144,128]{1,0:T(1,128)}', space=vmem, size = 0x12000, scoped, tag = 'internal scratch']
  %s0 = inlined_call_operand.hbm [shape: f32[2,4,8,128], index: 0, kind: input, shape index: {}]
  %s1 = inlined_call_operand.hbm [shape: s32[2,8,128], index: 1, kind: input, shape index: {}]
  %s2 = inlined_call_operand.hbm [shape: f32[2,1,8,128], index: 2, kind: output, shape index: {}]
  %s3 = sld [smem:[#allocation0]]
  $region49: #{tpu_custom_call.1} parent=0
    _
  %s5 = ssub.s32 1, %s3
  %s6 = scalar_select 0, %s5, %s3
  $region1: #{tpu_custom_call.1} parent=0
    #allocation2 [shape = 'u8[32768]{0}', space=vmem, size = 0x8000, scoped, tag = 'input window, operand 0']
    #allocation3 [shape = 's32[2]{0}', space=sflag, size = 0x8, scoped, tag = 'scoped memory for tpu_custom_call.1']
    #allocation4 [shape = 's32[2]{0}', space=sflag, size = 0x8, scoped, tag = 'scoped memory for tpu_custom_call.1']
    #allocation5 [shape = 'u8[8192]{0}', space=vmem, size = 0x2000, scoped, tag = 'input window, operand 1']
    #allocation6 [shape = 's32[2]{0}', space=sflag, size = 0x8, scoped, tag = 'scoped memory for tpu_custom_call.1']
    #allocation7 [shape = 'u8[8192]{0}', space=vmem, size = 0x2000, scoped, tag = 'output window, operand 0']
    %7 = vsyncpa [#allocation3], 0
    %s8 = scalar_lea.sflag [#allocation3], 1
    %9 = vsyncpa %s8, 0
    %10 = vsyncpa [#allocation6], 0
    %s11 = scalar_lea.sflag [#allocation6], 1
    %12 = vsyncpa %s11, 0
    %13 = vsyncpa [#allocation4], 0
    %s14 = scalar_lea.sflag [#allocation4], 1
    %15 = vsyncpa %s14, 0
    loop: start=0, step=1, limit=4
    $region2: #{tpu_custom_call.1} parent=1 // loop_pre_header
      _
    $region3: #{tpu_custom_call.1} parent=1 // loop_header
      %s17 = sphi 0, %s21
      %p18 = scmp.ge.s32.totalorder %s17, 4
      %s24 = sphi 0, %s36
      %s25 = sphi 0, %s32
      %s26 = sphi 0, %s24
      %s27 = sphi 0, %s25
      %s28 = sphi 0, %s26
      %s29 = sphi 0, %s27
      %s41 = sphi 0, %s43
      %s44 = sphi 0, %s41
      %s45 = sphi 0, %s44
      %s61 = sphi 0, %s45
      %s69 = sphi 0, %s71
      %s72 = sphi 0, %s69
      %s73 = sphi 0, %s72
      %s89 = sphi 0, %s73
      %s97 = sphi 0, %s99
      %s100 = sphi 0, %s97
      %s101 = sphi 0, %s100
      %s117 = sphi 0, %s101
    $region4: #{tpu_custom_call.1} parent=1 // loop_header_branch
      %20 = sbr.rel (%p18) target = $region8
    $region5: #{tpu_custom_call.1} parent=1 // loop_body
      %s22 = ssub.s32 %s17, 1
      %s23 = ssub.s32 %s17, 2
      %s30 = sadd.s32 1, %s25
      %p31 = scmp.ge.s32.totalorder %s30, 1
      %s32 = scalar_select %p31, 0, %s30
      %s33 = sadd.s32 1, %s24
      %s34 = scalar_select %p31, %s33, %s24
      %p35 = scmp.ge.s32.totalorder %s34, 2
      %s36 = scalar_select %p35, 0, %s34
      %s37 = ssub.s32 %s24, %s36
      %s38 = ssub.s32 %s25, %s32
      %s39 = sor.u32 %s37, %s38
      %p40 = scmp.eq.s32.totalorder %s39, 0
      %s42 = sadd.s32 %s41, 1
      %s43 = scalar_select %p40, %s41, %s42
      %p46 = pneg %p40
      %p47 = scmp.eq.s32.totalorder %s17, 1
      %p48 = por %p46, %p47
      %p49 = scmp.ne.s32.totalorder %s41, %s44
      %p50 = scmp.eq.s32.totalorder %s17, 0
      %p51 = por %p49, %p50
      %p52 = scmp.ne.s32.totalorder %s41, %s44
      %p53 = scmp.eq.s32.totalorder %s22, 1
      %p54 = por %p52, %p53
      %p55 = scmp.ne.s32.totalorder %s44, %s45
      %p56 = scmp.eq.s32.totalorder %s22, 0
      %p57 = por %p55, %p56
      %p58 = scmp.ne.s32.totalorder %s44, %s45
      %p59 = scmp.eq.s32.totalorder %s23, 1
      %p60 = por %p58, %p59
      %p62 = scmp.ne.s32.totalorder %s45, %s61
      %p63 = scmp.eq.s32.totalorder %s23, 0
      %p64 = por %p62, %p63
      %s65 = ssub.s32 %s24, %s36
      %s66 = ssub.s32 %s25, %s32
      %s67 = sor.u32 %s65, %s66
      %p68 = scmp.eq.s32.totalorder %s67, 0
      %s70 = sadd.s32 %s69, 1
      %s71 = scalar_select %p68, %s69, %s70
      %p74 = pneg %p68
      %p75 = scmp.eq.s32.totalorder %s17, 1
      %p76 = por %p74, %p75
      %p77 = scmp.ne.s32.totalorder %s69, %s72
      %p78 = scmp.eq.s32.totalorder %s17, 0
      %p79 = por %p77, %p78
      %p80 = scmp.ne.s32.totalorder %s69, %s72
      %p81 = scmp.eq.s32.totalorder %s22, 1
      %p82 = por %p80, %p81
      %p83 = scmp.ne.s32.totalorder %s72, %s73
      %p84 = scmp.eq.s32.totalorder %s22, 0
      %p85 = por %p83, %p84
      %p86 = scmp.ne.s32.totalorder %s72, %s73
      %p87 = scmp.eq.s32.totalorder %s23, 1
      %p88 = por %p86, %p87
      %p90 = scmp.ne.s32.totalorder %s73, %s89
      %p91 = scmp.eq.s32.totalorder %s23, 0
      %p92 = por %p90, %p91
      %s93 = ssub.s32 %s24, %s36
      %s94 = ssub.s32 %s25, %s32
      %s95 = sor.u32 %s93, %s94
      %p96 = scmp.eq.s32.totalorder %s95, 0
      %s98 = sadd.s32 %s97, 1
      %s99 = scalar_select %p96, %s97, %s98
      %p102 = pneg %p96
      %p103 = scmp.eq.s32.totalorder %s17, 1
      %p104 = por %p102, %p103
      %p105 = scmp.ne.s32.totalorder %s97, %s100
      %p106 = scmp.eq.s32.totalorder %s17, 0
      %p107 = por %p105, %p106
      %p108 = scmp.ne.s32.totalorder %s97, %s100
      %p109 = scmp.eq.s32.totalorder %s22, 1
      %p110 = por %p108, %p109
      %p111 = scmp.ne.s32.totalorder %s100, %s101
      %p112 = scmp.eq.s32.totalorder %s22, 0
      %p113 = por %p111, %p112
      %p114 = scmp.ne.s32.totalorder %s100, %s101
      %p115 = scmp.eq.s32.totalorder %s23, 1
      %p116 = por %p114, %p115
      %p118 = scmp.ne.s32.totalorder %s101, %s117
      %p119 = scmp.eq.s32.totalorder %s23, 0
      %p120 = por %p118, %p119
      %p121 = scmp.le.s32.totalorder 1, %s17
      %p122 = scmp.lt.s32.totalorder %s17, 3
      %p123 = pnand %p121, %p122
      %p124 = pneg %p123
      // Predicated region
      $region9: #{tpu_custom_call.1} parent=5 // pred_check
        _
      $region10: #{tpu_custom_call.1} parent=5 // pred_check_branch
        %126 = sbr.rel (%p123) target = $region12
      $region11: #{tpu_custom_call.1} parent=5 // pred_region
        %s127 = ssub.s32 %s17, 1
      $region12: #{tpu_custom_call.1} parent=5 // pred_fallthru
        _
      %p128 = scmp.lt.s32.totalorder %s17, 2
      // Predicated region
      $region13: #{tpu_custom_call.1} parent=5 // pred_check
        %p129 = pneg %p128
      $region14: #{tpu_custom_call.1} parent=5 // pred_check_branch
        %131 = sbr.rel (%p129) target = $region16
      $region15: #{tpu_custom_call.1} parent=5 // pred_region
        // Predicated region
        $region17: #{tpu_custom_call.1} parent=15 // pred_check
          %p132 = pneg %p51
        $region18: #{tpu_custom_call.1} parent=15 // pred_check_branch
          %134 = sbr.rel (%p132) target = $region20
        $region19: #{tpu_custom_call.1} parent=15 // pred_region
          %s135 = sand.u32 %s41, 1
          %s136 = scalar_lea.sflag [#allocation3], %s135
          %s137 = sand.u32 %s41, 1
          %s138 = smul.addr %s137, 32
          %s139 = scalar_lea.vmem [#allocation2], %s138
          %s141 = ssub.s32 512, 512
          %142 = vsyncadd %s136, %s141
          %s143 = smul.addr %s24, 4
          %s144 = sadd.s32 %s25, %s143
          %s145 = smul.addr %s144, 128
          %s146 = scalar_lea.hbm %s0, %s145
          %s147 = sshll.u32 %s139, 4
          %s148 = int_to_ptr.vmem [resolvable:$true] %s147
          %153 = dma.hbm_to_vmem [thread:$0]  %s146, 512, %s148, %s136, 128, 128, 8
        $region20: #{tpu_custom_call.1} parent=15 // pred_fallthru
          _
        // Predicated region
        $region21: #{tpu_custom_call.1} parent=15 // pred_check
          %p154 = pneg %p79
        $region22: #{tpu_custom_call.1} parent=15 // pred_check_branch
          %156 = sbr.rel (%p154) target = $region24
        $region23: #{tpu_custom_call.1} parent=15 // pred_region
          %s157 = sand.u32 %s69, 1
          %s158 = scalar_lea.sflag [#allocation6], %s157
          %s159 = sand.u32 %s69, 1
          %s160 = smul.addr %s159, 8
          %s161 = scalar_lea.vmem [#allocation5], %s160
          %s163 = ssub.s32 128, 128
          %164 = vsyncadd %s158, %s163
          %s165 = sadd.s32 %s25, %s24
          %s166 = smul.addr %s165, 128
          %s167 = scalar_lea.hbm %s1, %s166
          %s169 = sshll.u32 %s161, 4
          %s170 = int_to_ptr.vmem [resolvable:$true] %s169
          %172 = dma.hbm_to_vmem [thread:$0]  %s167, 128, %s170, %s158
        $region24: #{tpu_custom_call.1} parent=15 // pred_fallthru
          _
      $region16: #{tpu_custom_call.1} parent=5 // pred_fallthru
        _
      %p173 = scmp.le.s32.totalorder 1, %s17
      %p174 = scmp.lt.s32.totalorder %s17, 3
      %p175 = pnand %p173, %p174
      %p176 = pneg %p175
      // Predicated region
      $region25: #{tpu_custom_call.1} parent=5 // pred_check
        _
      $region26: #{tpu_custom_call.1} parent=5 // pred_check_branch
        %178 = sbr.rel (%p175) target = $region28
      $region27: #{tpu_custom_call.1} parent=5 // pred_region
        %s179 = ssub.s32 %s17, 1
        %s180 = sand.u32 %s44, 1
        %s181 = scalar_lea.sflag [#allocation3], %s180
        %s182 = sand.u32 %s44, 1
        %s183 = smul.addr %s182, 32
        %s184 = scalar_lea.vmem [#allocation2], %s183
        // Predicated region
        $region29: #{tpu_custom_call.1} parent=27 // pred_check
          %p185 = pneg %p57
        $region30: #{tpu_custom_call.1} parent=27 // pred_check_branch
          %187 = sbr.rel (%p185) target = $region32
        $region31: #{tpu_custom_call.1} parent=27 // pred_region
          %188 = dma.done %s181, 512
        $region32: #{tpu_custom_call.1} parent=27 // pred_fallthru
          _
        %s189 = sand.u32 %s72, 1
        %s190 = scalar_lea.sflag [#allocation6], %s189
        %s191 = sand.u32 %s72, 1
        %s192 = smul.addr %s191, 8
        %s193 = scalar_lea.vmem [#allocation5], %s192
        // Predicated region
        $region33: #{tpu_custom_call.1} parent=27 // pred_check
          %p194 = pneg %p85
        $region34: #{tpu_custom_call.1} parent=27 // pred_check_branch
          %196 = sbr.rel (%p194) target = $region36
        $region35: #{tpu_custom_call.1} parent=27 // pred_region
          %197 = dma.done %s190, 128
        $region36: #{tpu_custom_call.1} parent=27 // pred_fallthru
          _
        %s198 = sand.u32 %s44, 1
        %s199 = scalar_lea.sflag [#allocation3], %s198
        %s200 = sand.u32 %s44, 1
        %s201 = smul.addr %s200, 32
        %s202 = scalar_lea.vmem [#allocation2], %s201
        %p203 = pneg %p57
        %p204 = pneg %p54
        %s205 = sand.u32 %s72, 1
        %s206 = scalar_lea.sflag [#allocation6], %s205
        %s207 = sand.u32 %s72, 1
        %s208 = smul.addr %s207, 8
        %s209 = scalar_lea.vmem [#allocation5], %s208
        %p210 = pneg %p85
        %p211 = pneg %p82
        %p212 = pneg %p113
        %p213 = pneg %p110
        %s214 = sand.u32 %s100, 1
        %s215 = scalar_lea.sflag [#allocation4], %s214
        %s216 = sand.u32 %s100, 1
        %s217 = smul.addr %s216, 8
        %s218 = scalar_lea.vmem [#allocation7], %s217
        %v219 = vld [vmem:[%s193] sm:$0xff]
        %v220 = vld [vmem:[%s184] sm:$0xff]
        %vm221 = vcmp.eq.s32.totalorder %v219, 0
        %v222 = vsel %vm221, %v220, 0.0
        %s223 = scalar_lea.vmem %s184, 8 [#allocation2]
        %v224 = vld [vmem:[%s223] sm:$0xff]
        %v225 = vmax.f32 %v220, %v224
        %vm226 = vcmp.eq.s32.totalorder %v219, 1
        %v227 = vsel %vm226, %v224, %v222
        %s228 = scalar_lea.vmem %s184, 16 [#allocation2]
        %v229 = vld [vmem:[%s228] sm:$0xff]
        %v230 = vmax.f32 %v225, %v229
        %vm231 = vcmp.eq.s32.totalorder %v219, 2
        %v232 = vsel %vm231, %v229, %v227
        %s233 = scalar_lea.vmem %s184, 24 [#allocation2]
        %v234 = vld [vmem:[%s233] sm:$0xff]
        %v235 = vmax.f32 %v230, %v234
        %vm236 = vcmp.eq.s32.totalorder %v219, 3
        %v237 = vsel %vm236, %v234, %v232
        %v238 = vsub.f32 %v220, %v235
        %v239 = vmul.f32 %v238, 1.442695
        %v240 = vpow.pop %v239
        %v241 = vadd.f32 %v240, 0.0
        %v242 = vsub.f32 %v224, %v235
        %v243 = vmul.f32 %v242, 1.442695
        %v244 = vpow.pop %v243
        %v245 = vadd.f32 %v241, %v244
        %v246 = vsub.f32 %v229, %v235
        %v247 = vmul.f32 %v246, 1.442695
        %v248 = vpow.pop %v247
        %v249 = vadd.f32 %v245, %v248
        %v250 = vsub.f32 %v234, %v235
        %v251 = vmul.f32 %v250, 1.442695
        %v252 = vpow.pop %v251
        %v253 = vadd.f32 %v249, %v252
        %v254 = vsub.f32 %v237, %v235
        %v255 = vlog2.pop %v253
        %v256 = vmul.f32 %v255, 0.6931472
        %v257 = vsub.f32 %v254, %v256
        %v258 = vmul.f32 %v257, 1.442695
        %v259 = vpow.pop %v258
        %v260 = vsub.f32 1.0, %v259
        %v261 = vmul.f32 %v260, %v260
        %v262 = vsub.f32 0.0, %v261
        %v263 = vmul.f32 %v262, %v257
        %vm264 = vcmp.ge.s32.totalorder %v219, 0
        %vm265 = vcmp.lt.s32.totalorder %v219, 4
        %vm266 = vmand %vm264, %vm265
        %v267 = vsel %vm266, %v263, 0.0
        %v268 = vadd.f32 %v267, 0.0
        %269 = vst [vmem:[%s218] sm:$0xff] %v268
        %s270 = sand.u32 %s100, 1
        %s271 = scalar_lea.sflag [#allocation4], %s270
        %s272 = sand.u32 %s100, 1
        %s273 = smul.addr %s272, 8
        %s274 = scalar_lea.vmem [#allocation7], %s273
        // Predicated region
        $region37: #{tpu_custom_call.1} parent=27 // pred_check
          %p275 = pneg %p110
        $region38: #{tpu_custom_call.1} parent=27 // pred_check_branch
          %277 = sbr.rel (%p275) target = $region40
        $region39: #{tpu_custom_call.1} parent=27 // pred_region
          %s279 = ssub.s32 128, 128
          %280 = vsyncadd %s271, %s279
          %s281 = sadd.s32 %s27, %s26
          %s282 = smul.addr %s281, 128
          %s283 = scalar_lea.hbm %s2, %s282
          %s285 = sshll.u32 %s274, 4
          %s286 = int_to_ptr.vmem [resolvable:$true] %s285
          %288 = dma.vmem_to_hbm [thread:$0]  %s286, 128, %s283, %s271
        $region40: #{tpu_custom_call.1} parent=27 // pred_fallthru
          _
      $region28: #{tpu_custom_call.1} parent=5 // pred_fallthru
        _
      %p289 = scmp.le.s32.totalorder 2, %s17
      // Predicated region
      $region41: #{tpu_custom_call.1} parent=5 // pred_check
        %p290 = pneg %p289
      $region42: #{tpu_custom_call.1} parent=5 // pred_check_branch
        %292 = sbr.rel (%p290) target = $region44
      $region43: #{tpu_custom_call.1} parent=5 // pred_region
        %s293 = ssub.s32 %s17, 2
        // Predicated region
        $region45: #{tpu_custom_call.1} parent=43 // pred_check
          %p294 = pneg %p116
        $region46: #{tpu_custom_call.1} parent=43 // pred_check_branch
          %296 = sbr.rel (%p294) target = $region48
        $region47: #{tpu_custom_call.1} parent=43 // pred_region
          %s297 = sand.u32 %s101, 1
          %s298 = scalar_lea.sflag [#allocation4], %s297
          %s299 = sand.u32 %s101, 1
          %s300 = smul.addr %s299, 8
          %s301 = scalar_lea.vmem [#allocation7], %s300
          %302 = dma.done %s298, 128
        $region48: #{tpu_custom_call.1} parent=43 // pred_fallthru
          _
      $region44: #{tpu_custom_call.1} parent=5 // pred_fallthru
        _
    $region6: #{tpu_custom_call.1} parent=1 // loop_footer
      %s21 = sadd.s32 1, %s17
    $region7: #{tpu_custom_call.1} parent=1 // loop_footer_branch
      %16 = sbr.rel target = $region3
    $region8: #{tpu_custom_call.1} parent=1 // loop_exit
      _
    %303 = vsyncpa [#allocation3], 1
    %s304 = scalar_lea.sflag [#allocation3], 1
    %305 = vsyncpa %s304, 1
    %306 = vsyncpa [#allocation6], 1
    %s307 = scalar_lea.sflag [#allocation6], 1
    %308 = vsyncpa %s307, 1
    %309 = vsyncpa [#allocation4], 1
    %s310 = scalar_lea.sflag [#allocation4], 1
    %311 = vsyncpa %s310, 1

</llo_original>
